<compile_context>
chip_gen: v7x
topology: tpu7x:2x2x1
jax: 0.10.0
libtpu: 0.0.40
codegen_flags: <defaults>
</compile_context>

<pallas_src>
import functools
import math

import jax
import jax.numpy as jnp
import numpy as np
from jax.experimental import pallas as pl
from jax.experimental.pallas import tpu as pltpu


_SENTINEL = -1.0      # loss stored for ignored pixels (valid losses are >= 0)
_VALID_EDGE = -0.5    # loss > -0.5  <=>  pixel is valid
_NBINS = 32           # edges per counting pass (edge 0 is the validity edge)
_NREF = _NBINS - 1    # bisection refinement edges per round
_ROUNDS = 7           # 31-way bisection: 7 rounds resolve any finite f32 exactly
_MAX_F32_BITS = 0x7F7FFFFF


def _round_up(v, m):
    return (v + m - 1) // m * m


# --------------------------------------------------------------------------
# Kernel 1: per-pixel cross-entropy loss, sentinel-masked, dense flat output.
# --------------------------------------------------------------------------
def _ce_loss_kernel(ignore_index, t_ref, x_ref, l_ref):
    # t_ref: (B, TN) int32, x_ref: (B, C, TN) logits, l_ref: (B, TN//128, 128) f32.
    B, C, TN = x_ref.shape
    chunks = TN // 128
    # Small hoisted class-id iota (review: avoid a full (B, C, TN) iota).
    cls = jax.lax.broadcasted_iota(jnp.int32, (1, C, 128), 1)
    for r in range(chunks):                       # static unroll, chunks <= 16 typ.
        c0, c1 = r * 128, (r + 1) * 128
        x = x_ref[:, :, c0:c1].astype(jnp.float32)        # (B, C, 128)
        t = t_ref[:, c0:c1]                               # (B, 128)
        t3 = t[:, None, :]                                 # (B, 1, 128)
        m = jnp.max(x, axis=1, keepdims=True)              # (B, 1, 128)
        lse = jnp.log(jnp.sum(jnp.exp(x - m), axis=1, keepdims=True))
        # Select on raw logits; subtract/add the max once per pixel (review).
        sel = cls == t3
        true_x = jnp.sum(jnp.where(sel, x, 0.0), axis=1, keepdims=True)
        loss = (lse + m) - true_x                           # -log p_true >= 0
        loss = jnp.maximum(loss, 0.0)                        # kill FP-negative noise
        loss = jnp.where(t3 == ignore_index, jnp.float32(_SENTINEL), loss)
        l_ref[:, r:r + 1, :] = loss


# --------------------------------------------------------------------------
# Kernel C: per-tile counts of loss > edge_i for 32 SMEM edges.
# --------------------------------------------------------------------------
def _count_kernel(edges_ref, loss_ref, cnt_ref):
    # edges_ref: (32,) f32 SMEM; loss_ref: (B, TR, 128) f32; cnt_ref: (1, 1, 32) f32.
    x = loss_ref[...]
    for i in range(_NBINS):
        c = jnp.sum((x > edges_ref[i]).astype(jnp.float32), keepdims=True)  # (1,1,1)
        cnt_ref[:, :, i:i + 1] = c


# --------------------------------------------------------------------------
# Kernel 2: kept-loss sum + kept count, per-tile partials.
# --------------------------------------------------------------------------
def _ohem_sum_kernel(thr_ref, loss_ref, sum_ref, cnt_ref):
    # thr_ref: (1,) f32 SMEM (>= -0.5 so the -1.0 sentinel is never kept).
    x = loss_ref[...]
    kept = x > thr_ref[0]
    sum_ref[...] = jnp.sum(jnp.where(kept, x, 0.0), keepdims=True)
    cnt_ref[...] = jnp.sum(kept.astype(jnp.float32), keepdims=True)


# --------------------------------------------------------------------------
# Tiling helpers.
# --------------------------------------------------------------------------
def _vmem_limit_bytes():
    # Generation-derived limit (v7x has only 64 MiB/TC); explicit so v5e does
    # not regress to its 16 MiB scoped default.
    try:
        cap = int(pltpu.get_tpu_info().vmem_capacity_bytes)
    except Exception:
        cap = 64 * 1024 * 1024
    return max(32 * 1024 * 1024, min(cap // 2, 64 * 1024 * 1024))


def _pick_tile_n(B, C, N, logit_itemsize, vmem_limit):
    """Pixel-tile width for kernel 1: ~1-4 MiB blocks (review), legal layout."""
    sub = 8 * (4 // logit_itemsize)                      # sublane packing of C
    per_bpx = (_round_up(C, sub) * logit_itemsize        # logits block (padded C)
               + (_round_up(C, 8) * 4 if logit_itemsize < 4 else 0)  # f32 copy
               + 4 + 4)                                   # target + loss
    budget = min(vmem_limit // 3, 4 * 1024 * 1024)
    cap = budget // (2 * max(1, B * per_bpx))             # double-buffered
    cap = min(max(cap, 1024), 2048)                        # 8..16 lane chunks
    tn = None
    t = (cap // 1024) * 1024
    while t >= 1024:                                       # t % 1024 == 0 => rows % 8 == 0
        if N % t == 0:
            tn = t
            break
        t -= 1024
    if tn is None:
        tn = N                                             # full row is always legal
    # Prefer >= 8 grid steps so both v7x cores get balanced work.
    while tn > 1024 and N // tn < 8 and N % (tn // 2) == 0 and (tn // 2) % 1024 == 0:
        tn //= 2
    return tn


def _pick_tile_rows(B, rows, target_bytes=512 * 1024):
    """Row tile for the (B, rows, 128) loss view: ~0.5 MiB blocks, multi-step grid."""
    tr_target = max(8, min(1024, target_bytes // max(1, B * 128 * 4)))
    t = min((tr_target // 8) * 8, (rows // 8) * 8)
    while t >= 8:
        if rows % t == 0:
            return t
        t -= 8
    return rows


# --------------------------------------------------------------------------
# Pure-JAX replica of the PyTorch forward (verification + fallback path).
# --------------------------------------------------------------------------
def _reference(logits_nchw, target_nhw, *, ignore_index, threshold=0.7, min_kept=0.1):
    B, C, H, W = logits_nchw.shape
    N = H * W
    logits = logits_nchw.reshape(B, C, N).astype(jnp.float32)
    target = target_nhw.reshape(B, N).astype(jnp.int32)
    probs = jax.nn.softmax(logits, axis=1)
    p_true = jnp.take_along_axis(probs, target[:, None, :], axis=1)[:, 0, :]
    valid = target != ignore_index
    num_valid = jnp.sum(valid)
    mk = jnp.floor(jnp.float32(min_kept) * num_valid.astype(jnp.float32)).astype(jnp.int32)
    sorted_p = jnp.sort(jnp.where(valid, p_true, jnp.inf).reshape(-1))
    kth = jnp.take(sorted_p, jnp.maximum(mk - 1, 0))
    use_thr = jnp.logical_and(mk > 0, mk < num_valid)
    thr = jnp.where(use_thr, jnp.maximum(kth, jnp.float32(threshold)), jnp.inf)
    kept = jnp.logical_and(valid, p_true < thr)
    logp = jax.nn.log_softmax(logits, axis=1)
    loss = -jnp.take_along_axis(logp, target[:, None, :], axis=1)[:, 0, :]
    return jnp.sum(jnp.where(kept, loss, 0.0)) / jnp.sum(kept)


# --------------------------------------------------------------------------
# Public entry point.
# --------------------------------------------------------------------------
def ohem_cross_entropy_loss(logits_nchw, target_nhw, *, ignore_index,
                            threshold=0.7, min_kept=0.1):
    assert 0.0 <= min_kept <= 1.0
    B, C, H, W = logits_nchw.shape
    N = H * W
    if ignore_index is None:
        ignore_index = -100                      # never matches a real class id

    if N % 128 != 0:
        # TODO(synk): non-lane-aligned spatial size; no clean dense tiling -> pure-JAX path.
        return _reference(logits_nchw, target_nhw, ignore_index=ignore_index,
                          threshold=threshold, min_kept=min_kept)

    logits = logits_nchw.reshape(B, C, N)        # keep native dtype (bf16 OK)
    target = target_nhw.reshape(B, N).astype(jnp.int32)

    vmem_limit = _vmem_limit_bytes()
    tn = _pick_tile_n(B, C, N, logits.dtype.itemsize, vmem_limit)
    if tn == N and N // 128 > 64:
        # TODO(synk): no 1024-aligned divisor of N; avoid a huge unrolled kernel body.
        return _reference(logits_nchw, target_nhw, ignore_index=ignore_index,
                          threshold=threshold, min_kept=min_kept)

    rows = N // 128
    grid1 = (N // tn,)

    # --- Kernel 1: per-pixel CE loss, sentinel-masked, dense flat layout -----
    loss = pl.pallas_call(
        functools.partial(_ce_loss_kernel, ignore_index),
        out_shape=jax.ShapeDtypeStruct((B, rows, 128), jnp.float32),
        grid=grid1,
        in_specs=[pl.BlockSpec((B, tn), lambda j: (0, j)),
                  pl.BlockSpec((B, C, tn), lambda j: (0, 0, j))],
        out_specs=pl.BlockSpec((B, tn // 128, 128), lambda j: (0, j, 0)),
        compiler_params=pltpu.CompilerParams(
            dimension_semantics=("parallel",),
            vmem_limit_bytes=vmem_limit),
    )(target, logits)

    tr = _pick_tile_rows(B, rows)
    grid2 = (rows // tr,)
    common_params = pltpu.CompilerParams(dimension_semantics=("parallel",),
                                         vmem_limit_bytes=vmem_limit)

    count_call = pl.pallas_call(
        _count_kernel,
        out_shape=jax.ShapeDtypeStruct((grid2[0], 1, _NBINS), jnp.float32),
        grid=grid2,
        in_specs=[pl.BlockSpec(memory_space=pltpu.MemorySpace.SMEM),
                  pl.BlockSpec((B, tr, 128), lambda j: (0, j, 0))],
        out_specs=pl.BlockSpec((1, 1, _NBINS), lambda j: (j, 0, 0)),
        compiler_params=common_params,
    )

    def count_above(edges_f32):
        parts = count_call(edges_f32, loss)                 # (grid, 1, NBINS) f32
        return jnp.sum(parts.astype(jnp.int32), axis=(0, 1))  # exact int32 counts

    neg_log_thr = jnp.float32(-math.log(threshold))
    valid_edge = jnp.full((1,), _VALID_EDGE, jnp.float32)

    if min_kept > 0.0:
        # --- Exact k-th largest valid loss via bit-level interval bisection ---
        # Nonnegative f32 values order like their uint32 bit patterns, so each
        # round narrows [lo, hi] (bit space) by 31x using one counting pass.
        def edges_from_interval(lo, hi):
            i = jnp.arange(1, _NREF + 1, dtype=jnp.uint32)
            delta = hi - lo
            # lo + floor(i*delta/_NREF), overflow-free split arithmetic.
            return lo + (delta // _NREF) * i + ((delta % _NREF) * i) // _NREF

        lo = jnp.uint32(0)
        hi = jnp.uint32(_MAX_F32_BITS)
        num_valid = mk = mk_s = None
        for r in range(_ROUNDS):
            tbits = edges_from_interval(lo, hi)                              # (31,) u32
            edges = jnp.concatenate(
                [valid_edge, jax.lax.bitcast_convert_type(tbits, jnp.float32)])
            counts = count_above(edges)                                      # (32,) i32
            if r == 0:
                num_valid = counts[0]
                mk = jnp.floor(jnp.float32(min_kept)
                               * num_valid.astype(jnp.float32)).astype(jnp.int32)
                mk_s = jnp.maximum(mk, 1)
            below = counts[1:] < mk_s                 # first edge whose ">"-count < mk
            first = jnp.argmax(below).astype(jnp.int32)
            new_hi = tbits[first]
            prev = tbits[jnp.maximum(first - 1, 0)] + jnp.uint32(1)
            new_lo = jnp.where(first == 0, lo, prev)
            lo, hi = new_lo, new_hi
        kth_loss = jax.lax.bitcast_convert_type(hi, jnp.float32)  # exact mk-th largest

        use_thr = jnp.logical_and(mk > 0, mk < num_valid)
        # p < max(kth_p, threshold)  <=>  loss > min(kth_loss, -log(threshold))
        loss_thr = jnp.where(use_thr, jnp.minimum(kth_loss, neg_log_thr),
                             jnp.float32(_VALID_EDGE))
    else:
        loss_thr = jnp.float32(_VALID_EDGE)       # OHEM disabled: keep every valid pixel

    thr_arr = jnp.reshape(loss_thr, (1,)).astype(jnp.float32)

    # --- Kernel 2: masked reduction with per-tile partials (megacore-friendly) ---
    s_parts, c_parts = pl.pallas_call(
        _ohem_sum_kernel,
        out_shape=(jax.ShapeDtypeStruct((grid2[0], 1, 1), jnp.float32),
                   jax.ShapeDtypeStruct((grid2[0], 1, 1), jnp.float32)),
        grid=grid2,
        in_specs=[pl.BlockSpec(memory_space=pltpu.MemorySpace.SMEM),
                  pl.BlockSpec((B, tr, 128), lambda j: (0, j, 0))],
        out_specs=(pl.BlockSpec((1, 1, 1), lambda j: (j, 0, 0)),
                   pl.BlockSpec((1, 1, 1), lambda j: (j, 0, 0))),
        compiler_params=common_params,
    )(thr_arr, loss)

    total = jnp.sum(s_parts)
    count = jnp.sum(c_parts.astype(jnp.int32)).astype(jnp.float32)  # exact count
    # NOTE: count can be 0 (nothing kept) giving NaN -- same as PyTorch's mean
    # over an empty selection.
    return total / count


if __name__ == "__main__":
    key = jax.random.PRNGKey(0)
    k1, k2 = jax.random.split(key)
    B, C, H, W = 2, 4, 16, 16
    ignore_index = 3
    logits = jax.random.normal(k1, (B, C, H, W), dtype=jnp.float32)
    target = jax.random.randint(k2, (B, H, W), 0, C, dtype=jnp.int32)

    # Case 1: static-threshold regime; Case 2: min_kept-binding regime
    # (exercises the exact bit-bisection k-th statistic).
    for thr, mk_ratio in [(0.7, 0.1), (0.05, 0.9)]:
        out = ohem_cross_entropy_loss(logits, target, ignore_index=ignore_index,
                                      threshold=thr, min_kept=mk_ratio)
        out = jax.block_until_ready(out)
        ref = _reference(logits, target, ignore_index=ignore_index,
                         threshold=thr, min_kept=mk_ratio)
        assert np.isfinite(float(out)), f"non-finite loss: {out}"
        assert np.allclose(float(out), float(ref), rtol=1e-4, atol=1e-4), \
            (thr, mk_ratio, float(out), float(ref))
    print("KERNEL_OK")
</pallas_src>

<mosaic_0001>
module attributes {stable_mosaic.version = 11 : i64} {
  func.func @_ce_loss_kernel(%arg0: i32, %arg1: memref<2x256xi32, #tpu.memory_space<vmem>>, %arg2: memref<2x4x256xf32, #tpu.memory_space<vmem>>, %arg3: memref<2x2x128xf32, #tpu.memory_space<vmem>>) attributes {dimension_semantics = [#tpu.dimension_semantics<parallel>], iteration_bounds = array<i64: 1>, scalar_prefetch = 0 : i64, scratch_operands = 0 : i64, tpu.core_type = #tpu.core_type<tc>, window_params = [{transform_indices = @transform_0, window_bounds = array<i64: 2, 256>}, {transform_indices = @transform_1, window_bounds = array<i64: 2, 4, 256>}, {transform_indices = @transform_2, window_bounds = array<i64: 2, 2, 128>}]} {
    %0 = tpu.iota {dimensions = array<i32: 1>} : vector<1x4x128xi32>
    %c0 = arith.constant 0 : index
    %c0_0 = arith.constant 0 : index
    %c0_1 = arith.constant 0 : index
    %1 = vector.load %arg2[%c0, %c0_0, %c0_1] : memref<2x4x256xf32, #tpu.memory_space<vmem>>, vector<2x4x128xf32>
    %c0_2 = arith.constant 0 : index
    %c0_3 = arith.constant 0 : index
    %2 = vector.load %arg1[%c0_2, %c0_3] : memref<2x256xi32, #tpu.memory_space<vmem>>, vector<2x128xi32>
    %3 = vector.shape_cast %2 : vector<2x128xi32> to vector<2x1x128xi32>
    %cst = arith.constant dense<0xFF800000> : vector<2x128xf32>
    %4 = vector.multi_reduction <maximumf>, %1, %cst [1] : vector<2x4x128xf32> to vector<2x128xf32>
    %5 = vector.shape_cast %4 : vector<2x128xf32> to vector<2x1x128xf32>
    %6 = vector.broadcast %5 : vector<2x1x128xf32> to vector<2x4x128xf32>
    %7 = arith.subf %1, %6 : vector<2x4x128xf32>
    %8 = math.exp %7 : vector<2x4x128xf32>
    %cst_4 = arith.constant dense<0.000000e+00> : vector<2x128xf32>
    %9 = vector.multi_reduction <add>, %8, %cst_4 [1] : vector<2x4x128xf32> to vector<2x128xf32>
    %10 = vector.shape_cast %9 : vector<2x128xf32> to vector<2x1x128xf32>
    %11 = math.log %10 : vector<2x1x128xf32>
    %12 = vector.broadcast %0 : vector<1x4x128xi32> to vector<2x4x128xi32>
    %13 = vector.broadcast %3 : vector<2x1x128xi32> to vector<2x4x128xi32>
    %14 = arith.cmpi eq, %12, %13 : vector<2x4x128xi32>
    %cst_5 = arith.constant 0.000000e+00 : f32
    %15 = vector.broadcast %cst_5 : f32 to vector<2x4x128xf32>
    %16 = arith.select %14, %1, %15 : vector<2x4x128xi1>, vector<2x4x128xf32>
    %cst_6 = arith.constant dense<0.000000e+00> : vector<2x128xf32>
    %17 = vector.multi_reduction <add>, %16, %cst_6 [1] : vector<2x4x128xf32> to vector<2x128xf32>
    %18 = vector.shape_cast %17 : vector<2x128xf32> to vector<2x1x128xf32>
    %19 = arith.addf %11, %5 : vector<2x1x128xf32>
    %20 = arith.subf %19, %18 : vector<2x1x128xf32>
    %cst_7 = arith.constant 0.000000e+00 : f32
    %21 = vector.broadcast %cst_7 : f32 to vector<2x1x128xf32>
    %22 = arith.maximumf %20, %21 : vector<2x1x128xf32>
    %c3_i32 = arith.constant 3 : i32
    %23 = vector.broadcast %c3_i32 : i32 to vector<2x1x128xi32>
    %24 = arith.cmpi eq, %3, %23 : vector<2x1x128xi32>
    %cst_8 = arith.constant -1.000000e+00 : f32
    %25 = vector.broadcast %cst_8 : f32 to vector<2x1x128xf32>
    %26 = arith.select %24, %25, %22 : vector<2x1x128xi1>, vector<2x1x128xf32>
    %c0_9 = arith.constant 0 : index
    %c0_10 = arith.constant 0 : index
    %c0_11 = arith.constant 0 : index
    %27 = vector.load %arg3[%c0_9, %c0_10, %c0_11] : memref<2x2x128xf32, #tpu.memory_space<vmem>>, vector<2x1x128xf32>
    tpu.vector_store %arg3[%c0_9, %c0_10, %c0_11], %26 {strides = array<i32>} : memref<2x2x128xf32, #tpu.memory_space<vmem>>, vector<2x1x128xf32>,
    %c0_12 = arith.constant 0 : index
    %c0_13 = arith.constant 0 : index
    %c128 = arith.constant 128 : index
    %28 = vector.load %arg2[%c0_12, %c0_13, %c128] : memref<2x4x256xf32, #tpu.memory_space<vmem>>, vector<2x4x128xf32>
    %c0_14 = arith.constant 0 : index
    %c128_15 = arith.constant 128 : index
    %29 = vector.load %arg1[%c0_14, %c128_15] : memref<2x256xi32, #tpu.memory_space<vmem>>, vector<2x128xi32>
    %30 = vector.shape_cast %29 : vector<2x128xi32> to vector<2x1x128xi32>
    %cst_16 = arith.constant dense<0xFF800000> : vector<2x128xf32>
    %31 = vector.multi_reduction <maximumf>, %28, %cst_16 [1] : vector<2x4x128xf32> to vector<2x128xf32>
    %32 = vector.shape_cast %31 : vector<2x128xf32> to vector<2x1x128xf32>
    %33 = vector.broadcast %32 : vector<2x1x128xf32> to vector<2x4x128xf32>
    %34 = arith.subf %28, %33 : vector<2x4x128xf32>
    %35 = math.exp %34 : vector<2x4x128xf32>
    %cst_17 = arith.constant dense<0.000000e+00> : vector<2x128xf32>
    %36 = vector.multi_reduction <add>, %35, %cst_17 [1] : vector<2x4x128xf32> to vector<2x128xf32>
    %37 = vector.shape_cast %36 : vector<2x128xf32> to vector<2x1x128xf32>
    %38 = math.log %37 : vector<2x1x128xf32>
    %39 = vector.broadcast %0 : vector<1x4x128xi32> to vector<2x4x128xi32>
    %40 = vector.broadcast %30 : vector<2x1x128xi32> to vector<2x4x128xi32>
    %41 = arith.cmpi eq, %39, %40 : vector<2x4x128xi32>
    %cst_18 = arith.constant 0.000000e+00 : f32
    %42 = vector.broadcast %cst_18 : f32 to vector<2x4x128xf32>
    %43 = arith.select %41, %28, %42 : vector<2x4x128xi1>, vector<2x4x128xf32>
    %cst_19 = arith.constant dense<0.000000e+00> : vector<2x128xf32>
    %44 = vector.multi_reduction <add>, %43, %cst_19 [1] : vector<2x4x128xf32> to vector<2x128xf32>
    %45 = vector.shape_cast %44 : vector<2x128xf32> to vector<2x1x128xf32>
    %46 = arith.addf %38, %32 : vector<2x1x128xf32>
    %47 = arith.subf %46, %45 : vector<2x1x128xf32>
    %cst_20 = arith.constant 0.000000e+00 : f32
    %48 = vector.broadcast %cst_20 : f32 to vector<2x1x128xf32>
    %49 = arith.maximumf %47, %48 : vector<2x1x128xf32>
    %c3_i32_21 = arith.constant 3 : i32
    %50 = vector.broadcast %c3_i32_21 : i32 to vector<2x1x128xi32>
    %51 = arith.cmpi eq, %30, %50 : vector<2x1x128xi32>
    %cst_22 = arith.constant -1.000000e+00 : f32
    %52 = vector.broadcast %cst_22 : f32 to vector<2x1x128xf32>
    %53 = arith.select %51, %52, %49 : vector<2x1x128xi1>, vector<2x1x128xf32>
    %c0_23 = arith.constant 0 : index
    %c1 = arith.constant 1 : index
    %c0_24 = arith.constant 0 : index
    %54 = vector.load %arg3[%c0_23, %c1, %c0_24] : memref<2x2x128xf32, #tpu.memory_space<vmem>>, vector<2x1x128xf32>
    tpu.vector_store %arg3[%c0_23, %c1, %c0_24], %53 {strides = array<i32>} : memref<2x2x128xf32, #tpu.memory_space<vmem>>, vector<2x1x128xf32>,
    return
  }
  func.func @transform_0(%arg0: i32) -> (i32, i32) {
    %c0_i32 = arith.constant 0 : i32
    %c0_i32_0 = arith.constant 0 : i32
    return %c0_i32, %arg0 : i32, i32
  }
  func.func @transform_1(%arg0: i32) -> (i32, i32, i32) {
    %c0_i32 = arith.constant 0 : i32
    %c0_i32_0 = arith.constant 0 : i32
    %c0_i32_1 = arith.constant 0 : i32
    return %c0_i32, %c0_i32_0, %arg0 : i32, i32, i32
  }
  func.func @transform_2(%arg0: i32) -> (i32, i32, i32) {
    %c0_i32 = arith.constant 0 : i32
    %c0_i32_0 = arith.constant 0 : i32
    %c0_i32_1 = arith.constant 0 : i32
    return %c0_i32, %arg0, %c0_i32_0 : i32, i32, i32
  }
}

</mosaic_0001>

<llo_original>
// kernel: tpu_custom_call.1
$region0: #{tpu_custom_call.1}
  #allocation0 [shape = 'u32[]', space=smem, size = 0x4, offset = 0x4, fixed_abs, tag = 'smem constant byte address 0x4 - core index']
  #allocation1 [shape = 'u32[144,128]{1,0:T(1,128)}', space=vmem, size = 0x12000, scoped, tag = 'internal scratch']
  %s0 = inlined_call_operand.hbm [shape: s32[2,256], index: 0, kind: input, shape index: {}]
  %s1 = inlined_call_operand.hbm [shape: f32[2,4,256], index: 1, kind: input, shape index: {}]
  %s2 = inlined_call_operand.hbm [shape: f32[2,2,128], index: 2, kind: output, shape index: {}]
  %s3 = sld [smem:[#allocation0]]
  $region26: #{tpu_custom_call.1} parent=0
    _
  %s5 = ssub.s32 1, %s3
  %s6 = scalar_select 0, %s5, %s3
  $region1: #{tpu_custom_call.1} parent=0
    #allocation2 [shape = 'u8[2048]{0}', space=vmem, size = 0x800, scoped, tag = 'input window, operand 0, single buffered']
    #allocation3 [shape = 's32[1]{0}', space=sflag, size = 0x4, scoped, tag = 'scoped memory for tpu_custom_call.1']
    #allocation4 [shape = 's32[1]{0}', space=sflag, size = 0x4, scoped, tag = 'scoped memory for tpu_custom_call.1']
    #allocation5 [shape = 'u8[8192]{0}', space=vmem, size = 0x2000, scoped, tag = 'input window, operand 1, single buffered']
    #allocation6 [shape = 's32[1]{0}', space=sflag, size = 0x4, scoped, tag = 'scoped memory for tpu_custom_call.1']
    #allocation7 [shape = 'u8[2048]{0}', space=vmem, size = 0x800, scoped, tag = 'output window, operand 0, single buffered']
    %7 = vsyncpa [#allocation3], 0
    %8 = vsyncpa [#allocation6], 0
    %9 = vsyncpa [#allocation4], 0
    // Predicated region
    $region2: #{tpu_custom_call.1} parent=1 // pred_check
      _
    $region3: #{tpu_custom_call.1} parent=1 // pred_check_branch
      %11 = sbr.rel (0) target = $region5
    $region4: #{tpu_custom_call.1} parent=1 // pred_region
      %s13 = ssub.s32 64, 64
      %14 = vsyncadd [#allocation3], %s13
      %s16 = sshll.u32 [#allocation2], 4
      %s17 = int_to_ptr.vmem [resolvable:$true] %s16
      %19 = dma.hbm_to_vmem [thread:$0]  %s0, 64, %s17, [#allocation3]
    $region5: #{tpu_custom_call.1} parent=1 // pred_fallthru
      _
    // Predicated region
    $region6: #{tpu_custom_call.1} parent=1 // pred_check
      _
    $region7: #{tpu_custom_call.1} parent=1 // pred_check_branch
      %21 = sbr.rel (0) target = $region9
    $region8: #{tpu_custom_call.1} parent=1 // pred_region
      %s23 = ssub.s32 256, 256
      %24 = vsyncadd [#allocation6], %s23
      %s25 = sshll.u32 [#allocation5], 4
      %s26 = int_to_ptr.vmem [resolvable:$true] %s25
      %31 = dma.hbm_to_vmem [thread:$0]  %s1, 256, %s26, [#allocation6], 128, 128, 8
    $region9: #{tpu_custom_call.1} parent=1 // pred_fallthru
      _
    // Predicated region
    $region10: #{tpu_custom_call.1} parent=1 // pred_check
      _
    $region11: #{tpu_custom_call.1} parent=1 // pred_check_branch
      %33 = sbr.rel (0) target = $region13
    $region12: #{tpu_custom_call.1} parent=1 // pred_region
      %34 = dma.done [#allocation3], 64
    $region13: #{tpu_custom_call.1} parent=1 // pred_fallthru
      _
    // Predicated region
    $region14: #{tpu_custom_call.1} parent=1 // pred_check
      _
    $region15: #{tpu_custom_call.1} parent=1 // pred_check_branch
      %36 = sbr.rel (0) target = $region17
    $region16: #{tpu_custom_call.1} parent=1 // pred_region
      %37 = dma.done [#allocation6], 256
    $region17: #{tpu_custom_call.1} parent=1 // pred_fallthru
      _
    %v38 = vlaneseq
    %v39 = vshrl.u32 %v38, 7
    %v40 = vld [vmem:[#allocation5] sm:$0xf]
    %v41 = vld [vmem:[#allocation5 + $0x8] sm:$0xf]
    %v42 = vld [vmem:[#allocation2] sm:$0x3]
    %v44 = vunpack.c.l.s4 1966171168
    %v45 = vunpack.c.0.s8 %v44
    %v46 = vlaneseq
    %v47 = vshrl.u32 %v46, 7
    %v48 = vsub.s32 %v45, %v47
    %v49 = vrot.slane %v42, %v48
    %v50 = vcombine.high %v49, %v49
    %vm51 = vcmask 1043456
    %v52 = vsel %vm51, %v40, -inf
    %v53 = vrot.slane %v52, 4
    %v54 = vmax.f32 %v52, %v53
    %v55 = vrot.slane %v54, 2
    %v56 = vmax.f32 %v54, %v55
    %v57 = vrot.slane %v56, 1
    %v58 = vmax.f32 %v56, %v57
    %v59 = vsel %vm51, %v41, -inf
    %v60 = vrot.slane %v59, 4
    %v61 = vmax.f32 %v59, %v60
    %v62 = vrot.slane %v61, 2
    %v63 = vmax.f32 %v61, %v62
    %v64 = vrot.slane %v63, 1
    %v65 = vmax.f32 %v63, %v64
    %v66 = vsub.f32 %v40, %v58
    %v67 = vsub.f32 %v41, %v65
    %v68 = vmul.f32 %v66, 1.442695
    %v69 = vpow.pop %v68
    %v70 = vmul.f32 %v67, 1.442695
    %v71 = vpow.pop %v70
    %v72 = vsel %vm51, %v69, 0.0
    %v73 = vrot.slane %v72, 4
    %v74 = vadd.f32 %v72, %v73
    %v75 = vrot.slane %v74, 2
    %v76 = vadd.f32 %v74, %v75
    %v77 = vrot.slane %v76, 1
    %v78 = vadd.f32 %v76, %v77
    %v79 = vsel %vm51, %v71, 0.0
    %v80 = vrot.slane %v79, 4
    %v81 = vadd.f32 %v79, %v80
    %v82 = vrot.slane %v81, 2
    %v83 = vadd.f32 %v81, %v82
    %v84 = vrot.slane %v83, 1
    %v85 = vadd.f32 %v83, %v84
    %v86 = vlog2.pop %v78
    %v87 = vmul.f32 %v86, 0.6931472
    %v88 = vlog2.pop %v85
    %v89 = vmul.f32 %v88, 0.6931472
    %v90 = vlaneseq
    %v91 = vshrl.u32 %v90, 7
    %v92 = vsub.s32 0, %v91
    %v93 = vrot.slane %v49, %v92
    %v94 = vlaneseq
    %v95 = vshrl.u32 %v94, 7
    %v96 = vsub.s32 0, %v95
    %v97 = vrot.slane %v50, %v96
    %vm98 = vcmp.eq.s32.totalorder %v39, %v93
    %vm99 = vcmp.eq.s32.totalorder %v39, %v97
    %v100 = vsel %vm98, %v40, 0.0
    %v101 = vsel %vm99, %v41, 0.0
    %v102 = vsel %vm51, %v100, 0.0
    %v103 = vrot.slane %v102, 4
    %v104 = vadd.f32 %v102, %v103
    %v105 = vrot.slane %v104, 2
    %v106 = vadd.f32 %v104, %v105
    %v107 = vrot.slane %v106, 1
    %v108 = vadd.f32 %v106, %v107
    %v109 = vsel %vm51, %v101, 0.0
    %v110 = vrot.slane %v109, 4
    %v111 = vadd.f32 %v109, %v110
    %v112 = vrot.slane %v111, 2
    %v113 = vadd.f32 %v111, %v112
    %v114 = vrot.slane %v113, 1
    %v115 = vadd.f32 %v113, %v114
    %v116 = vadd.f32 %v87, %v58
    %v117 = vadd.f32 %v89, %v65
    %v118 = vsub.f32 %v116, %v108
    %v119 = vsub.f32 %v117, %v115
    %v120 = vmax.f32 %v118, 0.0
    %v121 = vmax.f32 %v119, 0.0
    %vm122 = vcmp.eq.s32.totalorder %v49, 3
    %vm123 = vcmp.eq.s32.totalorder %v50, 3
    %v124 = vsel %vm122, -1.0, %v120
    %v125 = vsel %vm123, -1.0, %v121
    %126 = vst [vmem:[#allocation7] sm:$0x1] %v124
    %127 = vst [vmem:[#allocation7 + $0x2] sm:$0x1] %v125
    %v128 = vld [vmem:[#allocation5 + $0x4] sm:$0xf]
    %v129 = vld [vmem:[#allocation5 + $0xc] sm:$0xf]
    %v130 = vld [vmem:[#allocation2 + $0x2] sm:$0x3]
    %v132 = vunpack.c.l.s4 1966171168
    %v133 = vunpack.c.0.s8 %v132
    %v134 = vlaneseq
    %v135 = vshrl.u32 %v134, 7
    %v136 = vsub.s32 %v133, %v135
    %v137 = vrot.slane %v130, %v136
    %v138 = vcombine.high %v137, %v137
    %v139 = vsel %vm51, %v128, -inf
    %v140 = vrot.slane %v139, 4
    %v141 = vmax.f32 %v139, %v140
    %v142 = vrot.slane %v141, 2
    %v143 = vmax.f32 %v141, %v142
    %v144 = vrot.slane %v143, 1
    %v145 = vmax.f32 %v143, %v144
    %v146 = vsel %vm51, %v129, -inf
    %v147 = vrot.slane %v146, 4
    %v148 = vmax.f32 %v146, %v147
    %v149 = vrot.slane %v148, 2
    %v150 = vmax.f32 %v148, %v149
    %v151 = vrot.slane %v150, 1
    %v152 = vmax.f32 %v150, %v151
    %v153 = vsub.f32 %v128, %v145
    %v154 = vsub.f32 %v129, %v152
    %v155 = vmul.f32 %v153, 1.442695
    %v156 = vpow.pop %v155
    %v157 = vmul.f32 %v154, 1.442695
    %v158 = vpow.pop %v157
    %v159 = vsel %vm51, %v156, 0.0
    %v160 = vrot.slane %v159, 4
    %v161 = vadd.f32 %v159, %v160
    %v162 = vrot.slane %v161, 2
    %v163 = vadd.f32 %v161, %v162
    %v164 = vrot.slane %v163, 1
    %v165 = vadd.f32 %v163, %v164
    %v166 = vsel %vm51, %v158, 0.0
    %v167 = vrot.slane %v166, 4
    %v168 = vadd.f32 %v166, %v167
    %v169 = vrot.slane %v168, 2
    %v170 = vadd.f32 %v168, %v169
    %v171 = vrot.slane %v170, 1
    %v172 = vadd.f32 %v170, %v171
    %v173 = vlog2.pop %v165
    %v174 = vmul.f32 %v173, 0.6931472
    %v175 = vlog2.pop %v172
    %v176 = vmul.f32 %v175, 0.6931472
    %v177 = vlaneseq
    %v178 = vshrl.u32 %v177, 7
    %v179 = vsub.s32 0, %v178
    %v180 = vrot.slane %v137, %v179
    %v181 = vlaneseq
    %v182 = vshrl.u32 %v181, 7
    %v183 = vsub.s32 0, %v182
    %v184 = vrot.slane %v138, %v183
    %vm185 = vcmp.eq.s32.totalorder %v39, %v180
    %vm186 = vcmp.eq.s32.totalorder %v39, %v184
    %v187 = vsel %vm185, %v128, 0.0
    %v188 = vsel %vm186, %v129, 0.0
    %v189 = vsel %vm51, %v187, 0.0
    %v190 = vrot.slane %v189, 4
    %v191 = vadd.f32 %v189, %v190
    %v192 = vrot.slane %v191, 2
    %v193 = vadd.f32 %v191, %v192
    %v194 = vrot.slane %v193, 1
    %v195 = vadd.f32 %v193, %v194
    %v196 = vsel %vm51, %v188, 0.0
    %v197 = vrot.slane %v196, 4
    %v198 = vadd.f32 %v196, %v197
    %v199 = vrot.slane %v198, 2
    %v200 = vadd.f32 %v198, %v199
    %v201 = vrot.slane %v200, 1
    %v202 = vadd.f32 %v200, %v201
    %v203 = vadd.f32 %v174, %v145
    %v204 = vadd.f32 %v176, %v152
    %v205 = vsub.f32 %v203, %v195
    %v206 = vsub.f32 %v204, %v202
    %v207 = vmax.f32 %v205, 0.0
    %v208 = vmax.f32 %v206, 0.0
    %vm209 = vcmp.eq.s32.totalorder %v137, 3
    %vm210 = vcmp.eq.s32.totalorder %v138, 3
    %v211 = vsel %vm209, -1.0, %v207
    %v212 = vsel %vm210, -1.0, %v208
    %213 = vst [vmem:[#allocation7 + $0x1] sm:$0x1] %v211
    %214 = vst [vmem:[#allocation7 + $0x3] sm:$0x1] %v212
    // Predicated region
    $region18: #{tpu_custom_call.1} parent=1 // pred_check
      _
    $region19: #{tpu_custom_call.1} parent=1 // pred_check_branch
      %216 = sbr.rel (0) target = $region21
    $region20: #{tpu_custom_call.1} parent=1 // pred_region
      %s218 = ssub.s32 64, 64
      %219 = vsyncadd [#allocation4], %s218
      %s220 = sshll.u32 [#allocation7], 4
      %s221 = int_to_ptr.vmem [resolvable:$true] %s220
      %226 = dma.vmem_to_hbm [thread:$0]  %s221, 64, %s2, [#allocation4], 32, 32, 2
    $region21: #{tpu_custom_call.1} parent=1 // pred_fallthru
      _
    // Predicated region
    $region22: #{tpu_custom_call.1} parent=1 // pred_check
      _
    $region23: #{tpu_custom_call.1} parent=1 // pred_check_branch
      %228 = sbr.rel (0) target = $region25
    $region24: #{tpu_custom_call.1} parent=1 // pred_region
      %229 = dma.done [#allocation4], 64
    $region25: #{tpu_custom_call.1} parent=1 // pred_fallthru
      _
    %230 = vsyncpa [#allocation3], 1
    %231 = vsyncpa [#allocation6], 1
    %232 = vsyncpa [#allocation4], 1

</llo_original>
